<compile_context>
chip_gen: v5e
topology: v5e:2x2
jax: 0.10.0
libtpu: 0.0.40
codegen_flags: <defaults>
</compile_context>

<pallas_src>
import jax
import jax.numpy as jnp
from jax.experimental import pallas as pl
from jax.experimental.pallas import tpu as pltpu


def _round_up(x, m):
    return ((x + m - 1) // m) * m


def qnet_kernel(x_ref, w1_ref, b1_ref, w2_ref, b2_ref, w3_ref, b3_ref, o_ref):
    # x_ref: (Din, TB) bf16, batch along lanes.  Weights in PyTorch (out, in)
    # layout; biases as (H, 1) f32 columns; b3 is an SMEM scalar.

    # Layer 1: single fused dot over the packed state+action features.
    h1 = jnp.dot(w1_ref[...], x_ref[...], preferred_element_type=jnp.float32)
    h1 = jnp.maximum(h1 + b1_ref[...], 0.0)                      # (H, TB) f32

    # Layer 2.
    h2 = jnp.dot(w2_ref[...], h1.astype(jnp.bfloat16),
                 preferred_element_type=jnp.float32)
    h2 = jnp.maximum(h2 + b2_ref[...], 0.0)                      # (H, TB) f32

    # Layer 3 (output dim 1): VPU multiply + sublane (XLU) reduction instead
    # of a degenerate matmul; result is already a lane-dense (1, TB) row.
    q = jnp.sum(h2 * w3_ref[...], axis=0, keepdims=True)         # (1, TB) f32
    o_ref[...] = q + b3_ref[0, 0]


def qnet_forward(state, action, params, *, block_batch=2048):
    """state: [B, num_inputs], action: [B, num_actions] -> q: [B, 1] (f32)."""
    w1, b1, w2, b2, w3, b3 = params
    B = state.shape[0]
    H, Din = w1.shape
    assert state.shape[1] + action.shape[1] == Din

    # Tiny wrapper-side concat + single bf16 cast of the [B, Din] activations.
    x = jnp.concatenate([state.astype(jnp.float32),
                         action.astype(jnp.float32)],
                        axis=1).astype(jnp.bfloat16)              # (B, Din)

    # Balanced tiling: fat tiles amortize per-step overhead; an even number of
    # parallel steps (when there is enough work) lets v7x use both TCs; tile
    # size is a multiple of 128 so the lane dim of every block is aligned.
    num_tiles = max(1, -(-B // block_batch))
    if num_tiles == 1 and B >= 256:
        num_tiles = 2
    if num_tiles > 1 and num_tiles % 2 != 0:
        num_tiles += 1
    TB = _round_up(-(-B // num_tiles), 128)
    Bp = num_tiles * TB
    if Bp != B:
        x = jnp.pad(x, ((0, Bp - B), (0, 0)))
    xt = x.T                                                      # (Din, Bp)

    def resident(shape):
        # Same block every grid step -> fetched once, stays VMEM-resident.
        return pl.BlockSpec(shape, lambda i: (0,) * len(shape))

    q_row = pl.pallas_call(
        qnet_kernel,
        out_shape=jax.ShapeDtypeStruct((1, Bp), jnp.float32),
        grid=(num_tiles,),
        in_specs=[
            pl.BlockSpec((Din, TB), lambda i: (0, i)),            # x (streamed)
            resident((H, Din)),                                   # W1 (bf16)
            resident((H, 1)),                                     # b1 (f32)
            resident((H, H)),                                     # W2 (bf16)
            resident((H, 1)),                                     # b2 (f32)
            resident((H, 1)),                                     # W3^T col (f32)
            pl.BlockSpec(memory_space=pltpu.MemorySpace.SMEM),    # b3 scalar
        ],
        out_specs=pl.BlockSpec((1, TB), lambda i: (0, i)),        # lane-dense q
        compiler_params=pltpu.CompilerParams(
            dimension_semantics=("parallel",)),
    )(xt, w1, b1, w2, b2, w3, b3)

    return q_row[0, :B].reshape(B, 1)


def init_qnet_params(key, num_inputs, num_actions, hidden_size=256, init_w=0.003):
    """Init matching PyTorch QNet conventions.

    linear1/linear2: U(-1/sqrt(fan_in), 1/sqrt(fan_in)); linear3: U(-init_w, init_w).
    Matmul weights stay in PyTorch (out, in) layout but are stored bf16 for the
    MXU; biases are f32 columns; W3 is stored as an (H, 1) column for the VPU
    reduction; b3 is a (1, 1) f32 scalar (lives in SMEM inside the kernel).
    """
    d_in = num_inputs + num_actions
    k1, k2, k3, k4, k5, k6 = jax.random.split(key, 6)

    lim1 = 1.0 / float(d_in) ** 0.5
    w1 = jax.random.uniform(k1, (hidden_size, d_in), jnp.float32, -lim1, lim1)
    b1 = jax.random.uniform(k2, (hidden_size, 1), jnp.float32, -lim1, lim1)

    lim2 = 1.0 / float(hidden_size) ** 0.5
    w2 = jax.random.uniform(k3, (hidden_size, hidden_size), jnp.float32, -lim2, lim2)
    b2 = jax.random.uniform(k4, (hidden_size, 1), jnp.float32, -lim2, lim2)

    w3 = jax.random.uniform(k5, (hidden_size, 1), jnp.float32, -init_w, init_w)
    b3 = jax.random.uniform(k6, (1, 1), jnp.float32, -init_w, init_w)

    return (w1.astype(jnp.bfloat16), b1, w2.astype(jnp.bfloat16), b2, w3, b3)


if __name__ == "__main__":
    # Small shapes consistent with the module's forward.
    batch = 2
    num_inputs = 8
    num_actions = 4
    hidden_size = 256   # module default

    key = jax.random.PRNGKey(0)
    k_state, k_action, k_params = jax.random.split(key, 3)

    state = jax.random.normal(k_state, (batch, num_inputs), jnp.float32)
    action = jax.random.normal(k_action, (batch, num_actions), jnp.float32)
    params = init_qnet_params(k_params, num_inputs, num_actions, hidden_size)

    q = qnet_forward(state, action, params)
    q = jax.block_until_ready(q)

    # Pure-JAX reference with matching numerics (bf16 MXU inputs, f32 accum).
    w1, b1, w2, b2, w3, b3 = params
    xb = jnp.concatenate([state, action], axis=1).astype(jnp.bfloat16)
    h1 = jnp.maximum(
        jnp.dot(xb, w1.T, preferred_element_type=jnp.float32) + b1.T, 0.0)
    h2 = jnp.maximum(
        jnp.dot(h1.astype(jnp.bfloat16), w2.T,
                preferred_element_type=jnp.float32) + b2.T, 0.0)
    q_ref = jnp.dot(h2, w3) + b3

    assert q.shape == (batch, 1)
    assert jnp.allclose(q, q_ref, atol=5e-3, rtol=5e-3), (q, q_ref)

    print("KERNEL_OK")
</pallas_src>

<mosaic_0001>
module attributes {stable_mosaic.version = 11 : i64} {
  func.func @qnet_kernel(%arg0: i32, %arg1: memref<12x128xbf16, #tpu.memory_space<vmem>>, %arg2: memref<256x12xbf16, #tpu.memory_space<vmem>>, %arg3: memref<256x1xf32, #tpu.memory_space<vmem>>, %arg4: memref<256x256xbf16, #tpu.memory_space<vmem>>, %arg5: memref<256x1xf32, #tpu.memory_space<vmem>>, %arg6: memref<256x1xf32, #tpu.memory_space<vmem>>, %arg7: memref<1x1xf32, #tpu.memory_space<smem>>, %arg8: memref<1x128xf32, #tpu.memory_space<vmem>>) attributes {dimension_semantics = [#tpu.dimension_semantics<parallel>], iteration_bounds = array<i64: 1>, scalar_prefetch = 0 : i64, scratch_operands = 0 : i64, tpu.core_type = #tpu.core_type<tc>, window_params = [{transform_indices = @transform_0, window_bounds = array<i64: 12, 128>}, {pipeline_mode = #tpu.pipeline_mode<synchronous>, transform_indices = @transform_1, window_bounds = array<i64: 256, 12>}, {pipeline_mode = #tpu.pipeline_mode<synchronous>, transform_indices = @transform_2, window_bounds = array<i64: 256, 1>}, {pipeline_mode = #tpu.pipeline_mode<synchronous>, transform_indices = @transform_3, window_bounds = array<i64: 256, 256>}, {pipeline_mode = #tpu.pipeline_mode<synchronous>, transform_indices = @transform_4, window_bounds = array<i64: 256, 1>}, {pipeline_mode = #tpu.pipeline_mode<synchronous>, transform_indices = @transform_5, window_bounds = array<i64: 256, 1>}, {transform_indices = @transform_6, window_bounds = array<i64: 1, 1>}, {transform_indices = @transform_7, window_bounds = array<i64: 1, 128>}]} {
    %c0 = arith.constant 0 : index
    %c0_0 = arith.constant 0 : index
    %0 = vector.load %arg2[%c0, %c0_0] : memref<256x12xbf16, #tpu.memory_space<vmem>>, vector<256x12xbf16>
    %c0_1 = arith.constant 0 : index
    %c0_2 = arith.constant 0 : index
    %1 = vector.load %arg1[%c0_1, %c0_2] : memref<12x128xbf16, #tpu.memory_space<vmem>>, vector<12x128xbf16>
    %cst = arith.constant dense<0.000000e+00> : vector<256x128xf32>
    %2 = tpu.matmul %0, %1, %cst {dimension_numbers = #tpu.dot_dimension_numbers<[1], [0], [0], [1], [0, 0, 1, 1], [], []>} : vector<256x12xbf16>, vector<12x128xbf16>, vector<256x128xf32> -> vector<256x128xf32>
    %c0_3 = arith.constant 0 : index
    %c0_4 = arith.constant 0 : index
    %3 = vector.load %arg3[%c0_3, %c0_4] : memref<256x1xf32, #tpu.memory_space<vmem>>, vector<256x1xf32>
    %4 = vector.broadcast %3 : vector<256x1xf32> to vector<256x128xf32>
    %5 = arith.addf %2, %4 : vector<256x128xf32>
    %cst_5 = arith.constant 0.000000e+00 : f32
    %6 = vector.broadcast %cst_5 : f32 to vector<256x128xf32>
    %7 = arith.maximumf %5, %6 : vector<256x128xf32>
    %c0_6 = arith.constant 0 : index
    %c0_7 = arith.constant 0 : index
    %8 = vector.load %arg4[%c0_6, %c0_7] : memref<256x256xbf16, #tpu.memory_space<vmem>>, vector<256x256xbf16>
    %9 = arith.truncf %7 : vector<256x128xf32> to vector<256x128xbf16>
    %cst_8 = arith.constant dense<0.000000e+00> : vector<256x128xf32>
    %10 = tpu.matmul %8, %9, %cst_8 {dimension_numbers = #tpu.dot_dimension_numbers<[1], [0], [0], [1], [0, 0, 1, 1], [], []>} : vector<256x256xbf16>, vector<256x128xbf16>, vector<256x128xf32> -> vector<256x128xf32>
    %c0_9 = arith.constant 0 : index
    %c0_10 = arith.constant 0 : index
    %11 = vector.load %arg5[%c0_9, %c0_10] : memref<256x1xf32, #tpu.memory_space<vmem>>, vector<256x1xf32>
    %12 = vector.broadcast %11 : vector<256x1xf32> to vector<256x128xf32>
    %13 = arith.addf %10, %12 : vector<256x128xf32>
    %cst_11 = arith.constant 0.000000e+00 : f32
    %14 = vector.broadcast %cst_11 : f32 to vector<256x128xf32>
    %15 = arith.maximumf %13, %14 : vector<256x128xf32>
    %c0_12 = arith.constant 0 : index
    %c0_13 = arith.constant 0 : index
    %16 = vector.load %arg6[%c0_12, %c0_13] : memref<256x1xf32, #tpu.memory_space<vmem>>, vector<256x1xf32>
    %17 = vector.broadcast %16 : vector<256x1xf32> to vector<256x128xf32>
    %18 = arith.mulf %15, %17 : vector<256x128xf32>
    %cst_14 = arith.constant dense<0.000000e+00> : vector<128xf32>
    %19 = vector.multi_reduction <add>, %18, %cst_14 [0] : vector<256x128xf32> to vector<128xf32>
    %20 = vector.shape_cast %19 : vector<128xf32> to vector<1x128xf32>
    %c0_15 = arith.constant 0 : index
    %c0_16 = arith.constant 0 : index
    %21 = memref.load %arg7[%c0_15, %c0_16] : memref<1x1xf32, #tpu.memory_space<smem>>
    %22 = vector.broadcast %21 : f32 to vector<1x128xf32>
    %23 = arith.addf %20, %22 : vector<1x128xf32>
    %c0_17 = arith.constant 0 : index
    %c0_18 = arith.constant 0 : index
    %24 = vector.load %arg8[%c0_17, %c0_18] : memref<1x128xf32, #tpu.memory_space<vmem>>, vector<1x128xf32>
    tpu.vector_store %arg8[%c0_17, %c0_18], %23 {strides = array<i32>} : memref<1x128xf32, #tpu.memory_space<vmem>>, vector<1x128xf32>,
    return
  }
  func.func @transform_0(%arg0: i32) -> (i32, i32) {
    %c0_i32 = arith.constant 0 : i32
    %c0_i32_0 = arith.constant 0 : i32
    return %c0_i32, %arg0 : i32, i32
  }
  func.func @transform_1(%arg0: i32) -> (i32, i32) {
    %c0_i32 = arith.constant 0 : i32
    %c0_i32_0 = arith.constant 0 : i32
    %c0_i32_1 = arith.constant 0 : i32
    return %c0_i32, %c0_i32_0 : i32, i32
  }
  func.func @transform_2(%arg0: i32) -> (i32, i32) {
    %c0_i32 = arith.constant 0 : i32
    %c0_i32_0 = arith.constant 0 : i32
    %c0_i32_1 = arith.constant 0 : i32
    return %c0_i32, %c0_i32_0 : i32, i32
  }
  func.func @transform_3(%arg0: i32) -> (i32, i32) {
    %c0_i32 = arith.constant 0 : i32
    %c0_i32_0 = arith.constant 0 : i32
    %c0_i32_1 = arith.constant 0 : i32
    return %c0_i32, %c0_i32_0 : i32, i32
  }
  func.func @transform_4(%arg0: i32) -> (i32, i32) {
    %c0_i32 = arith.constant 0 : i32
    %c0_i32_0 = arith.constant 0 : i32
    %c0_i32_1 = arith.constant 0 : i32
    return %c0_i32, %c0_i32_0 : i32, i32
  }
  func.func @transform_5(%arg0: i32) -> (i32, i32) {
    %c0_i32 = arith.constant 0 : i32
    %c0_i32_0 = arith.constant 0 : i32
    %c0_i32_1 = arith.constant 0 : i32
    return %c0_i32, %c0_i32_0 : i32, i32
  }
  func.func @transform_6(%arg0: i32) -> (i32, i32) {
    %c0_i32 = arith.constant 0 : i32
    %c0_i32_0 = arith.constant 0 : i32
    %c0_i32_1 = arith.constant 0 : i32
    return %c0_i32, %c0_i32_0 : i32, i32
  }
  func.func @transform_7(%arg0: i32) -> (i32, i32) {
    %c0_i32 = arith.constant 0 : i32
    %c0_i32_0 = arith.constant 0 : i32
    return %c0_i32, %arg0 : i32, i32
  }
}

</mosaic_0001>

<llo_original>
// kernel: tpu_custom_call.1
$region0: #{tpu_custom_call.1}
  #allocation0 [shape = 'u32[]', space=smem, size = 0x4, offset = 0x4, fixed_abs, tag = 'smem constant byte address 0x4 - core index']
  #allocation1 [shape = 'u32[72,128]{1,0:T(1,128)}', space=vmem, size = 0x9000, scoped, tag = 'internal scratch']
  #allocation2 [shape = 'f32[1,1]{1,0:T(1,128)S(6)}', space=smem, size = 0x200, scoped, tag = 'scoped memory for tpu_custom_call.1']
  %s0 = inlined_call_operand.vmem [shape: bf16[12,128], index: 0, kind: input, shape index: {}]
  %s1 = inlined_call_operand.vmem [shape: bf16[256,12], index: 1, kind: input, shape index: {}]
  %s2 = inlined_call_operand.vmem [shape: f32[256,1], index: 2, kind: input, shape index: {}]
  %s3 = inlined_call_operand.vmem [shape: bf16[256,256], index: 3, kind: input, shape index: {}]
  %s4 = inlined_call_operand.vmem [shape: f32[256,1], index: 4, kind: input, shape index: {}]
  %s5 = inlined_call_operand.vmem [shape: f32[256,1], index: 5, kind: input, shape index: {}]
  %s6 = inlined_call_operand.<no memory space> [shape: f32[1,1], index: 6, kind: input, shape index: {}]
  %s7 = inlined_call_operand.hbm [shape: f32[1,128], index: 7, kind: output, shape index: {}]
  %s8 = sld [smem:[#allocation0]]
  $region38: #{tpu_custom_call.1} parent=0
    _
  %s10 = ssub.s32 1, %s8
  %s11 = scalar_select 0, %s10, %s8
  %12 = sst [smem:[#allocation2]] %s6
  $region1: #{tpu_custom_call.1} parent=0
    #allocation3 [shape = 'u8[512]{0}', space=vmem, size = 0x400, scoped, tag = 'output window, operand 0, single buffered']
    #allocation4 [shape = 's32[1]{0}', space=sflag, size = 0x4, scoped, tag = 'scoped memory for tpu_custom_call.1']
    %13 = vsyncpa [#allocation4], 0
    // Predicated region
    $region2: #{tpu_custom_call.1} parent=1 // pred_check
      _
    $region3: #{tpu_custom_call.1} parent=1 // pred_check_branch
      %15 = sbr.rel (0) target = $region5
    $region4: #{tpu_custom_call.1} parent=1 // pred_region
      _
    $region5: #{tpu_custom_call.1} parent=1 // pred_fallthru
      _
    // Predicated region
    $region6: #{tpu_custom_call.1} parent=1 // pred_check
      _
    $region7: #{tpu_custom_call.1} parent=1 // pred_check_branch
      %17 = sbr.rel (0) target = $region9
    $region8: #{tpu_custom_call.1} parent=1 // pred_region
      _
    $region9: #{tpu_custom_call.1} parent=1 // pred_fallthru
      _
    // Predicated region
    $region10: #{tpu_custom_call.1} parent=1 // pred_check
      _
    $region11: #{tpu_custom_call.1} parent=1 // pred_check_branch
      %19 = sbr.rel (0) target = $region13
    $region12: #{tpu_custom_call.1} parent=1 // pred_region
      _
    $region13: #{tpu_custom_call.1} parent=1 // pred_fallthru
      _
    // Predicated region
    $region14: #{tpu_custom_call.1} parent=1 // pred_check
      _
    $region15: #{tpu_custom_call.1} parent=1 // pred_check_branch
      %21 = sbr.rel (0) target = $region17
    $region16: #{tpu_custom_call.1} parent=1 // pred_region
      _
    $region17: #{tpu_custom_call.1} parent=1 // pred_fallthru
      _
    // Predicated region
    $region18: #{tpu_custom_call.1} parent=1 // pred_check
      _
    $region19: #{tpu_custom_call.1} parent=1 // pred_check_branch
      %23 = sbr.rel (0) target = $region21
    $region20: #{tpu_custom_call.1} parent=1 // pred_region
      _
    $region21: #{tpu_custom_call.1} parent=1 // pred_fallthru
      _
    // Predicated region
    $region22: #{tpu_custom_call.1} parent=1 // pred_check
      _
    $region23: #{tpu_custom_call.1} parent=1 // pred_check_branch
      %25 = sbr.rel (0) target = $region25
    $region24: #{tpu_custom_call.1} parent=1 // pred_region
      _
    $region25: #{tpu_custom_call.1} parent=1 // pred_fallthru
      _
    // Predicated region
    $region26: #{tpu_custom_call.1} parent=1 // pred_check
      _
    $region27: #{tpu_custom_call.1} parent=1 // pred_check_branch
      %27 = sbr.rel (0) target = $region29
    $region28: #{tpu_custom_call.1} parent=1 // pred_region
      _
    $region29: #{tpu_custom_call.1} parent=1 // pred_fallthru
      _
    %v29 = vld [vmem:[%s1] sm:$0xf]
    %v30 = vld [vmem:[%s1 + $0x4] sm:$0xf]
    %v31 = vld [vmem:[%s1 + $0x8] sm:$0xf]
    %v32 = vld [vmem:[%s1 + $0xc] sm:$0xf]
    %v33 = vld [vmem:[%s1 + $0x10] sm:$0xf]
    %v34 = vld [vmem:[%s1 + $0x14] sm:$0xf]
    %v35 = vld [vmem:[%s1 + $0x18] sm:$0xf]
    %v36 = vld [vmem:[%s1 + $0x1c] sm:$0xf]
    %v37 = vld [vmem:[%s1 + $0x20] sm:$0xf]
    %v38 = vld [vmem:[%s1 + $0x24] sm:$0xf]
    %v39 = vld [vmem:[%s1 + $0x28] sm:$0xf]
    %v40 = vld [vmem:[%s1 + $0x2c] sm:$0xf]
    %v41 = vld [vmem:[%s1 + $0x30] sm:$0xf]
    %v42 = vld [vmem:[%s1 + $0x34] sm:$0xf]
    %v43 = vld [vmem:[%s1 + $0x38] sm:$0xf]
    %v44 = vld [vmem:[%s1 + $0x3c] sm:$0xf]
    %v45 = vld [vmem:[%s1 + $0x40] sm:$0xf]
    %v46 = vld [vmem:[%s1 + $0x44] sm:$0xf]
    %v47 = vld [vmem:[%s1 + $0x48] sm:$0xf]
    %v48 = vld [vmem:[%s1 + $0x4c] sm:$0xf]
    %v49 = vld [vmem:[%s1 + $0x50] sm:$0xf]
    %v50 = vld [vmem:[%s1 + $0x54] sm:$0xf]
    %v51 = vld [vmem:[%s1 + $0x58] sm:$0xf]
    %v52 = vld [vmem:[%s1 + $0x5c] sm:$0xf]
    %v53 = vld [vmem:[%s1 + $0x60] sm:$0xf]
    %v54 = vld [vmem:[%s1 + $0x64] sm:$0xf]
    %v55 = vld [vmem:[%s1 + $0x68] sm:$0xf]
    %v56 = vld [vmem:[%s1 + $0x6c] sm:$0xf]
    %v57 = vld [vmem:[%s1 + $0x70] sm:$0xf]
    %v58 = vld [vmem:[%s1 + $0x74] sm:$0xf]
    %v59 = vld [vmem:[%s1 + $0x78] sm:$0xf]
    %v60 = vld [vmem:[%s1 + $0x7c] sm:$0xf]
    %v61 = vld [vmem:[%s0] sm:$0xf]
    %v62 = vld [vmem:[%s0 + $0x4] sm:$0x3]
    %v63 = vld [vmem:[%s2] sm:$0xff]
    %v64 = vld [vmem:[%s2 + $0x8] sm:$0xff]
    %v65 = vld [vmem:[%s2 + $0x10] sm:$0xff]
    %v66 = vld [vmem:[%s2 + $0x18] sm:$0xff]
    %v67 = vld [vmem:[%s2 + $0x20] sm:$0xff]
    %v68 = vld [vmem:[%s2 + $0x28] sm:$0xff]
    %v69 = vld [vmem:[%s2 + $0x30] sm:$0xff]
    %v70 = vld [vmem:[%s2 + $0x38] sm:$0xff]
    %v71 = vld [vmem:[%s2 + $0x40] sm:$0xff]
    %v72 = vld [vmem:[%s2 + $0x48] sm:$0xff]
    %v73 = vld [vmem:[%s2 + $0x50] sm:$0xff]
    %v74 = vld [vmem:[%s2 + $0x58] sm:$0xff]
    %v75 = vld [vmem:[%s2 + $0x60] sm:$0xff]
    %v76 = vld [vmem:[%s2 + $0x68] sm:$0xff]
    %v77 = vld [vmem:[%s2 + $0x70] sm:$0xff]
    %v78 = vld [vmem:[%s2 + $0x78] sm:$0xff]
    %v79 = vld [vmem:[%s2 + $0x80] sm:$0xff]
    %v80 = vld [vmem:[%s2 + $0x88] sm:$0xff]
    %v81 = vld [vmem:[%s2 + $0x90] sm:$0xff]
    %v82 = vld [vmem:[%s2 + $0x98] sm:$0xff]
    %v83 = vld [vmem:[%s2 + $0xa0] sm:$0xff]
    %v84 = vld [vmem:[%s2 + $0xa8] sm:$0xff]
    %v85 = vld [vmem:[%s2 + $0xb0] sm:$0xff]
    %v86 = vld [vmem:[%s2 + $0xb8] sm:$0xff]
    %v87 = vld [vmem:[%s2 + $0xc0] sm:$0xff]
    %v88 = vld [vmem:[%s2 + $0xc8] sm:$0xff]
    %v89 = vld [vmem:[%s2 + $0xd0] sm:$0xff]
    %v90 = vld [vmem:[%s2 + $0xd8] sm:$0xff]
    %v91 = vld [vmem:[%s2 + $0xe0] sm:$0xff]
    %v92 = vld [vmem:[%s2 + $0xe8] sm:$0xff]
    %v93 = vld [vmem:[%s2 + $0xf0] sm:$0xff]
    %v94 = vld [vmem:[%s2 + $0xf8] sm:$0xff]
    %96 = vset.pattern.permute.xlu0 0
    %97 = vperm.xlu0 %96, %v63
    %v98 = vpop.permute.xlu0 %97
    %101 = vset.pattern.permute.xlu0 0
    %102 = vperm.xlu0 %101, %v64
    %v103 = vpop.permute.xlu0 %102
    %106 = vset.pattern.permute.xlu0 0
    %107 = vperm.xlu0 %106, %v65
    %v108 = vpop.permute.xlu0 %107
    %111 = vset.pattern.permute.xlu0 0
    %112 = vperm.xlu0 %111, %v66
    %v113 = vpop.permute.xlu0 %112
    %116 = vset.pattern.permute.xlu0 0
    %117 = vperm.xlu0 %116, %v67
    %v118 = vpop.permute.xlu0 %117
    %121 = vset.pattern.permute.xlu0 0
    %122 = vperm.xlu0 %121, %v68
    %v123 = vpop.permute.xlu0 %122
    %126 = vset.pattern.permute.xlu0 0
    %127 = vperm.xlu0 %126, %v69
    %v128 = vpop.permute.xlu0 %127
    %131 = vset.pattern.permute.xlu0 0
    %132 = vperm.xlu0 %131, %v70
    %v133 = vpop.permute.xlu0 %132
    %136 = vset.pattern.permute.xlu0 0
    %137 = vperm.xlu0 %136, %v71
    %v138 = vpop.permute.xlu0 %137
    %141 = vset.pattern.permute.xlu0 0
    %142 = vperm.xlu0 %141, %v72
    %v143 = vpop.permute.xlu0 %142
    %146 = vset.pattern.permute.xlu0 0
    %147 = vperm.xlu0 %146, %v73
    %v148 = vpop.permute.xlu0 %147
    %151 = vset.pattern.permute.xlu0 0
    %152 = vperm.xlu0 %151, %v74
    %v153 = vpop.permute.xlu0 %152
    %156 = vset.pattern.permute.xlu0 0
    %157 = vperm.xlu0 %156, %v75
    %v158 = vpop.permute.xlu0 %157
    %161 = vset.pattern.permute.xlu0 0
    %162 = vperm.xlu0 %161, %v76
    %v163 = vpop.permute.xlu0 %162
    %166 = vset.pattern.permute.xlu0 0
    %167 = vperm.xlu0 %166, %v77
    %v168 = vpop.permute.xlu0 %167
    %171 = vset.pattern.permute.xlu0 0
    %172 = vperm.xlu0 %171, %v78
    %v173 = vpop.permute.xlu0 %172
    %176 = vset.pattern.permute.xlu0 0
    %177 = vperm.xlu0 %176, %v79
    %v178 = vpop.permute.xlu0 %177
    %181 = vset.pattern.permute.xlu0 0
    %182 = vperm.xlu0 %181, %v80
    %v183 = vpop.permute.xlu0 %182
    %186 = vset.pattern.permute.xlu0 0
    %187 = vperm.xlu0 %186, %v81
    %v188 = vpop.permute.xlu0 %187
    %191 = vset.pattern.permute.xlu0 0
    %192 = vperm.xlu0 %191, %v82
    %v193 = vpop.permute.xlu0 %192
    %196 = vset.pattern.permute.xlu0 0
    %197 = vperm.xlu0 %196, %v83
    %v198 = vpop.permute.xlu0 %197
    %201 = vset.pattern.permute.xlu0 0
    %202 = vperm.xlu0 %201, %v84
    %v203 = vpop.permute.xlu0 %202
    %206 = vset.pattern.permute.xlu0 0
    %207 = vperm.xlu0 %206, %v85
    %v208 = vpop.permute.xlu0 %207
    %211 = vset.pattern.permute.xlu0 0
    %212 = vperm.xlu0 %211, %v86
    %v213 = vpop.permute.xlu0 %212
    %216 = vset.pattern.permute.xlu0 0
    %217 = vperm.xlu0 %216, %v87
    %v218 = vpop.permute.xlu0 %217
    %221 = vset.pattern.permute.xlu0 0
    %222 = vperm.xlu0 %221, %v88
    %v223 = vpop.permute.xlu0 %222
    %226 = vset.pattern.permute.xlu0 0
    %227 = vperm.xlu0 %226, %v89
    %v228 = vpop.permute.xlu0 %227
    %231 = vset.pattern.permute.xlu0 0
    %232 = vperm.xlu0 %231, %v90
    %v233 = vpop.permute.xlu0 %232
    %236 = vset.pattern.permute.xlu0 0
    %237 = vperm.xlu0 %236, %v91
    %v238 = vpop.permute.xlu0 %237
    %241 = vset.pattern.permute.xlu0 0
    %242 = vperm.xlu0 %241, %v92
    %v243 = vpop.permute.xlu0 %242
    %246 = vset.pattern.permute.xlu0 0
    %247 = vperm.xlu0 %246, %v93
    %v248 = vpop.permute.xlu0 %247
    %251 = vset.pattern.permute.xlu0 0
    %252 = vperm.xlu0 %251, %v94
    %v253 = vpop.permute.xlu0 %252
    %v287 = vunpack.c.l.b16 %v29
    %v288 = vunpack.c.l.b16 %v30
    %v289 = vunpack.c.l.b16 %v31
    %v290 = vunpack.c.l.b16 %v32
    %v291 = vunpack.c.l.b16 %v33
    %v292 = vunpack.c.l.b16 %v34
    %v293 = vunpack.c.l.b16 %v35
    %v294 = vunpack.c.l.b16 %v36
    %v295 = vunpack.c.l.b16 %v37
    %v296 = vunpack.c.l.b16 %v38
    %v297 = vunpack.c.l.b16 %v39
    %v298 = vunpack.c.l.b16 %v40
    %v299 = vunpack.c.l.b16 %v41
    %v300 = vunpack.c.l.b16 %v42
    %v301 = vunpack.c.l.b16 %v43
    %v302 = vunpack.c.l.b16 %v44
    %v303 = vunpack.c.l.b16 %v45
    %v304 = vunpack.c.l.b16 %v46
    %v305 = vunpack.c.l.b16 %v47
    %v306 = vunpack.c.l.b16 %v48
    %v307 = vunpack.c.l.b16 %v49
    %v308 = vunpack.c.l.b16 %v50
    %v309 = vunpack.c.l.b16 %v51
    %v310 = vunpack.c.l.b16 %v52
    %v311 = vunpack.c.l.b16 %v53
    %v312 = vunpack.c.l.b16 %v54
    %v313 = vunpack.c.l.b16 %v55
    %v314 = vunpack.c.l.b16 %v56
    %v315 = vunpack.c.l.b16 %v57
    %v316 = vunpack.c.l.b16 %v58
    %v317 = vunpack.c.l.b16 %v59
    %v318 = vunpack.c.l.b16 %v60
    %v319 = vpack.c.b16 %v288, %v287
    %v320 = vpack.c.b16 %v290, %v289
    %v321 = vpack.c.b16 %v292, %v291
    %v322 = vpack.c.b16 %v294, %v293
    %v323 = vpack.c.b16 %v296, %v295
    %v324 = vpack.c.b16 %v298, %v297
    %v325 = vpack.c.b16 %v300, %v299
    %v326 = vpack.c.b16 %v302, %v301
    %v327 = vpack.c.b16 %v304, %v303
    %v328 = vpack.c.b16 %v306, %v305
    %v329 = vpack.c.b16 %v308, %v307
    %v330 = vpack.c.b16 %v310, %v309
    %v331 = vpack.c.b16 %v312, %v311
    %v332 = vpack.c.b16 %v314, %v313
    %v333 = vpack.c.b16 %v316, %v315
    %v334 = vpack.c.b16 %v318, %v317
    %v337 = vunpack.c.l.b16 %v61
    %v338 = vunpack.c.l.b16 %v62
    %v339 = vpack.c.b16 %v338, %v337
    %vm340 = vcmask 97280
    %v342 = vsel %vm340, %v319, 0
    %v345 = vsel %vm340, %v320, 0
    %v348 = vsel %vm340, %v321, 0
    %v351 = vsel %vm340, %v322, 0
    %v354 = vsel %vm340, %v323, 0
    %v357 = vsel %vm340, %v324, 0
    %v360 = vsel %vm340, %v325, 0
    %v363 = vsel %vm340, %v326, 0
    %v366 = vsel %vm340, %v327, 0
    %v369 = vsel %vm340, %v328, 0
    %v372 = vsel %vm340, %v329, 0
    %v375 = vsel %vm340, %v330, 0
    %v378 = vsel %vm340, %v331, 0
    %v381 = vsel %vm340, %v332, 0
    %v384 = vsel %vm340, %v333, 0
    %v387 = vsel %vm340, %v334, 0
    %vm389 = vcmask 1045504
    %v391 = vsel %vm389, %v339, 0
    %393 = vmatpush.bf16.msra.mxu0 0
    %394 = vmatpush.bf16.msra.mxu0 0
    %395 = vmatpush.bf16.msra.mxu0 0
    %396 = vmatpush.bf16.msra.mxu0 0
    %397 = vmatpush.bf16.msra.mxu0 0
    %398 = vmatpush.bf16.msra.mxu0 0
    %399 = vmatpush.bf16.msra.mxu0 0
    %400 = vmatpush.bf16.msra.mxu0 %v391
    %401 = vmatmul.bf16.gmra.mxu0 %v342
    %v402 = vpop.f32.mrf.mxu0
    %v403 = vadd.f32 %v98, %v402
    %v404 = vpop.f32.mrf.mxu0
    %v405 = vadd.f32 %v103, %v404
    %406 = vmatmul.bf16.gmra.mxu0 %v345
    %v407 = vpop.f32.mrf.mxu0
    %v408 = vadd.f32 %v108, %v407
    %v409 = vpop.f32.mrf.mxu0
    %v410 = vadd.f32 %v113, %v409
    %411 = vmatmul.bf16.gmra.mxu0 %v348
    %v412 = vpop.f32.mrf.mxu0
    %v413 = vadd.f32 %v118, %v412
    %v414 = vpop.f32.mrf.mxu0
    %v415 = vadd.f32 %v123, %v414
    %416 = vmatmul.bf16.gmra.mxu0 %v351
    %v417 = vpop.f32.mrf.mxu0
    %v418 = vadd.f32 %v128, %v417
    %v419 = vpop.f32.mrf.mxu0
    %v420 = vadd.f32 %v133, %v419
    %421 = vmatmul.bf16.gmra.mxu0 %v354
    %v422 = vpop.f32.mrf.mxu0
    %v423 = vadd.f32 %v138, %v422
    %v424 = vpop.f32.mrf.mxu0
    %v425 = vadd.f32 %v143, %v424
    %426 = vmatmul.bf16.gmra.mxu0 %v357
    %v427 = vpop.f32.mrf.mxu0
    %v428 = vadd.f32 %v148, %v427
    %v429 = vpop.f32.mrf.mxu0
    %v430 = vadd.f32 %v153, %v429
    %431 = vmatmul.bf16.gmra.mxu0 %v360
    %v432 = vpop.f32.mrf.mxu0
    %v433 = vadd.f32 %v158, %v432
    %v434 = vpop.f32.mrf.mxu0
    %v435 = vadd.f32 %v163, %v434
    %436 = vmatmul.bf16.gmra.mxu0 %v363
    %v437 = vpop.f32.mrf.mxu0
    %v438 = vadd.f32 %v168, %v437
    %v439 = vpop.f32.mrf.mxu0
    %v440 = vadd.f32 %v173, %v439
    %441 = vmatmul.bf16.gmra.mxu0 %v366
    %v442 = vpop.f32.mrf.mxu0
    %v443 = vadd.f32 %v178, %v442
    %v444 = vpop.f32.mrf.mxu0
    %v445 = vadd.f32 %v183, %v444
    %446 = vmatmul.bf16.gmra.mxu0 %v369
    %v447 = vpop.f32.mrf.mxu0
    %v448 = vadd.f32 %v188, %v447
    %v449 = vpop.f32.mrf.mxu0
    %v450 = vadd.f32 %v193, %v449
    %451 = vmatmul.bf16.gmra.mxu0 %v372
    %v452 = vpop.f32.mrf.mxu0
    %v453 = vadd.f32 %v198, %v452
    %v454 = vpop.f32.mrf.mxu0
    %v455 = vadd.f32 %v203, %v454
    %456 = vmatmul.bf16.gmra.mxu0 %v375
    %v457 = vpop.f32.mrf.mxu0
    %v458 = vadd.f32 %v208, %v457
    %v459 = vpop.f32.mrf.mxu0
    %v460 = vadd.f32 %v213, %v459
    %461 = vmatmul.bf16.gmra.mxu0 %v378
    %v462 = vpop.f32.mrf.mxu0
    %v463 = vadd.f32 %v218, %v462
    %v464 = vpop.f32.mrf.mxu0
    %v465 = vadd.f32 %v223, %v464
    %466 = vmatmul.bf16.gmra.mxu0 %v381
    %v467 = vpop.f32.mrf.mxu0
    %v468 = vadd.f32 %v228, %v467
    %v469 = vpop.f32.mrf.mxu0
    %v470 = vadd.f32 %v233, %v469
    %471 = vmatmul.bf16.gmra.mxu0 %v384
    %v472 = vpop.f32.mrf.mxu0
    %v473 = vadd.f32 %v238, %v472
    %v474 = vpop.f32.mrf.mxu0
    %v475 = vadd.f32 %v243, %v474
    %476 = vmatmul.bf16.gmra.mxu0 %v387
    %v477 = vpop.f32.mrf.mxu0
    %v478 = vadd.f32 %v248, %v477
    %v479 = vpop.f32.mrf.mxu0
    %v480 = vadd.f32 %v253, %v479
    %481 = vdwg.mxu0
    %v482 = vmax.f32 %v403, 0.0
    %v483 = vmax.f32 %v405, 0.0
    %v484 = vmax.f32 %v408, 0.0
    %v485 = vmax.f32 %v410, 0.0
    %v486 = vmax.f32 %v413, 0.0
    %v487 = vmax.f32 %v415, 0.0
    %v488 = vmax.f32 %v418, 0.0
    %v489 = vmax.f32 %v420, 0.0
    %v490 = vmax.f32 %v423, 0.0
    %v491 = vmax.f32 %v425, 0.0
    %v492 = vmax.f32 %v428, 0.0
    %v493 = vmax.f32 %v430, 0.0
    %v494 = vmax.f32 %v433, 0.0
    %v495 = vmax.f32 %v435, 0.0
    %v496 = vmax.f32 %v438, 0.0
    %v497 = vmax.f32 %v440, 0.0
    %v498 = vmax.f32 %v443, 0.0
    %v499 = vmax.f32 %v445, 0.0
    %v500 = vmax.f32 %v448, 0.0
    %v501 = vmax.f32 %v450, 0.0
    %v502 = vmax.f32 %v453, 0.0
    %v503 = vmax.f32 %v455, 0.0
    %v504 = vmax.f32 %v458, 0.0
    %v505 = vmax.f32 %v460, 0.0
    %v506 = vmax.f32 %v463, 0.0
    %v507 = vmax.f32 %v465, 0.0
    %v508 = vmax.f32 %v468, 0.0
    %v509 = vmax.f32 %v470, 0.0
    %v510 = vmax.f32 %v473, 0.0
    %v511 = vmax.f32 %v475, 0.0
    %v512 = vmax.f32 %v478, 0.0
    %v513 = vmax.f32 %v480, 0.0
    %v514 = vld [vmem:[%s3] sm:$0xff]
    %v515 = vld [vmem:[%s3 + $0x8] sm:$0xff]
    %v516 = vld [vmem:[%s3 + $0x10] sm:$0xff]
    %v517 = vld [vmem:[%s3 + $0x18] sm:$0xff]
    %v518 = vld [vmem:[%s3 + $0x20] sm:$0xff]
    %v519 = vld [vmem:[%s3 + $0x28] sm:$0xff]
    %v520 = vld [vmem:[%s3 + $0x30] sm:$0xff]
    %v521 = vld [vmem:[%s3 + $0x38] sm:$0xff]
    %v522 = vld [vmem:[%s3 + $0x40] sm:$0xff]
    %v523 = vld [vmem:[%s3 + $0x48] sm:$0xff]
    %v524 = vld [vmem:[%s3 + $0x50] sm:$0xff]
    %v525 = vld [vmem:[%s3 + $0x58] sm:$0xff]
    %v526 = vld [vmem:[%s3 + $0x60] sm:$0xff]
    %v527 = vld [vmem:[%s3 + $0x68] sm:$0xff]
    %v528 = vld [vmem:[%s3 + $0x70] sm:$0xff]
    %v529 = vld [vmem:[%s3 + $0x78] sm:$0xff]
    %v530 = vld [vmem:[%s3 + $0x80] sm:$0xff]
    %v531 = vld [vmem:[%s3 + $0x88] sm:$0xff]
    %v532 = vld [vmem:[%s3 + $0x90] sm:$0xff]
    %v533 = vld [vmem:[%s3 + $0x98] sm:$0xff]
    %v534 = vld [vmem:[%s3 + $0xa0] sm:$0xff]
    %v535 = vld [vmem:[%s3 + $0xa8] sm:$0xff]
    %v536 = vld [vmem:[%s3 + $0xb0] sm:$0xff]
    %v537 = vld [vmem:[%s3 + $0xb8] sm:$0xff]
    %v538 = vld [vmem:[%s3 + $0xc0] sm:$0xff]
    %v539 = vld [vmem:[%s3 + $0xc8] sm:$0xff]
    %v540 = vld [vmem:[%s3 + $0xd0] sm:$0xff]
    %v541 = vld [vmem:[%s3 + $0xd8] sm:$0xff]
    %v542 = vld [vmem:[%s3 + $0xe0] sm:$0xff]
    %v543 = vld [vmem:[%s3 + $0xe8] sm:$0xff]
    %v544 = vld [vmem:[%s3 + $0xf0] sm:$0xff]
    %v545 = vld [vmem:[%s3 + $0xf8] sm:$0xff]
    %v546 = vpack.c.bf16 %v483, %v482
    %v547 = vpack.c.bf16 %v485, %v484
    %v548 = vpack.c.bf16 %v487, %v486
    %v549 = vpack.c.bf16 %v489, %v488
    %v550 = vpack.c.bf16 %v491, %v490
    %v551 = vpack.c.bf16 %v493, %v492
    %v552 = vpack.c.bf16 %v495, %v494
    %v553 = vpack.c.bf16 %v497, %v496
    %v554 = vpack.c.bf16 %v499, %v498
    %v555 = vpack.c.bf16 %v501, %v500
    %v556 = vpack.c.bf16 %v503, %v502
    %v557 = vpack.c.bf16 %v505, %v504
    %v558 = vpack.c.bf16 %v507, %v506
    %v559 = vpack.c.bf16 %v509, %v508
    %v560 = vpack.c.bf16 %v511, %v510
    %v561 = vpack.c.bf16 %v513, %v512
    %v562 = vld [vmem:[%s4] sm:$0xff]
    %v563 = vld [vmem:[%s4 + $0x8] sm:$0xff]
    %v564 = vld [vmem:[%s4 + $0x10] sm:$0xff]
    %v565 = vld [vmem:[%s4 + $0x18] sm:$0xff]
    %v566 = vld [vmem:[%s4 + $0x20] sm:$0xff]
    %v567 = vld [vmem:[%s4 + $0x28] sm:$0xff]
    %v568 = vld [vmem:[%s4 + $0x30] sm:$0xff]
    %v569 = vld [vmem:[%s4 + $0x38] sm:$0xff]
    %v570 = vld [vmem:[%s4 + $0x40] sm:$0xff]
    %v571 = vld [vmem:[%s4 + $0x48] sm:$0xff]
    %v572 = vld [vmem:[%s4 + $0x50] sm:$0xff]
    %v573 = vld [vmem:[%s4 + $0x58] sm:$0xff]
    %v574 = vld [vmem:[%s4 + $0x60] sm:$0xff]
    %v575 = vld [vmem:[%s4 + $0x68] sm:$0xff]
    %v576 = vld [vmem:[%s4 + $0x70] sm:$0xff]
    %v577 = vld [vmem:[%s4 + $0x78] sm:$0xff]
    %v578 = vld [vmem:[%s4 + $0x80] sm:$0xff]
    %v579 = vld [vmem:[%s4 + $0x88] sm:$0xff]
    %v580 = vld [vmem:[%s4 + $0x90] sm:$0xff]
    %v581 = vld [vmem:[%s4 + $0x98] sm:$0xff]
    %v582 = vld [vmem:[%s4 + $0xa0] sm:$0xff]
    %v583 = vld [vmem:[%s4 + $0xa8] sm:$0xff]
    %v584 = vld [vmem:[%s4 + $0xb0] sm:$0xff]
    %v585 = vld [vmem:[%s4 + $0xb8] sm:$0xff]
    %v586 = vld [vmem:[%s4 + $0xc0] sm:$0xff]
    %v587 = vld [vmem:[%s4 + $0xc8] sm:$0xff]
    %v588 = vld [vmem:[%s4 + $0xd0] sm:$0xff]
    %v589 = vld [vmem:[%s4 + $0xd8] sm:$0xff]
    %v590 = vld [vmem:[%s4 + $0xe0] sm:$0xff]
    %v591 = vld [vmem:[%s4 + $0xe8] sm:$0xff]
    %v592 = vld [vmem:[%s4 + $0xf0] sm:$0xff]
    %v593 = vld [vmem:[%s4 + $0xf8] sm:$0xff]
    %595 = vset.pattern.permute.xlu0 0
    %596 = vperm.xlu0 %595, %v562
    %v597 = vpop.permute.xlu0 %596
    %600 = vset.pattern.permute.xlu0 0
    %601 = vperm.xlu0 %600, %v563
    %v602 = vpop.permute.xlu0 %601
    %605 = vset.pattern.permute.xlu0 0
    %606 = vperm.xlu0 %605, %v564
    %v607 = vpop.permute.xlu0 %606
    %610 = vset.pattern.permute.xlu0 0
    %611 = vperm.xlu0 %610, %v565
    %v612 = vpop.permute.xlu0 %611
    %615 = vset.pattern.permute.xlu0 0
    %616 = vperm.xlu0 %615, %v566
    %v617 = vpop.permute.xlu0 %616
    %620 = vset.pattern.permute.xlu0 0
    %621 = vperm.xlu0 %620, %v567
    %v622 = vpop.permute.xlu0 %621
    %625 = vset.pattern.permute.xlu0 0
    %626 = vperm.xlu0 %625, %v568
    %v627 = vpop.permute.xlu0 %626
    %630 = vset.pattern.permute.xlu0 0
    %631 = vperm.xlu0 %630, %v569
    %v632 = vpop.permute.xlu0 %631
    %635 = vset.pattern.permute.xlu0 0
    %636 = vperm.xlu0 %635, %v570
    %v637 = vpop.permute.xlu0 %636
    %640 = vset.pattern.permute.xlu0 0
    %641 = vperm.xlu0 %640, %v571
    %v642 = vpop.permute.xlu0 %641
    %645 = vset.pattern.permute.xlu0 0
    %646 = vperm.xlu0 %645, %v572
    %v647 = vpop.permute.xlu0 %646
    %650 = vset.pattern.permute.xlu0 0
    %651 = vperm.xlu0 %650, %v573
    %v652 = vpop.permute.xlu0 %651
    %655 = vset.pattern.permute.xlu0 0
    %656 = vperm.xlu0 %655, %v574
    %v657 = vpop.permute.xlu0 %656
    %660 = vset.pattern.permute.xlu0 0
    %661 = vperm.xlu0 %660, %v575
    %v662 = vpop.permute.xlu0 %661
    %665 = vset.pattern.permute.xlu0 0
    %666 = vperm.xlu0 %665, %v576
    %v667 = vpop.permute.xlu0 %666
    %670 = vset.pattern.permute.xlu0 0
    %671 = vperm.xlu0 %670, %v577
    %v672 = vpop.permute.xlu0 %671
    %675 = vset.pattern.permute.xlu0 0
    %676 = vperm.xlu0 %675, %v578
    %v677 = vpop.permute.xlu0 %676
    %680 = vset.pattern.permute.xlu0 0
    %681 = vperm.xlu0 %680, %v579
    %v682 = vpop.permute.xlu0 %681
    %685 = vset.pattern.permute.xlu0 0
    %686 = vperm.xlu0 %685, %v580
    %v687 = vpop.permute.xlu0 %686
    %690 = vset.pattern.permute.xlu0 0
    %691 = vperm.xlu0 %690, %v581
    %v692 = vpop.permute.xlu0 %691
    %695 = vset.pattern.permute.xlu0 0
    %696 = vperm.xlu0 %695, %v582
    %v697 = vpop.permute.xlu0 %696
    %700 = vset.pattern.permute.xlu0 0
    %701 = vperm.xlu0 %700, %v583
    %v702 = vpop.permute.xlu0 %701
    %705 = vset.pattern.permute.xlu0 0
    %706 = vperm.xlu0 %705, %v584
    %v707 = vpop.permute.xlu0 %706
    %710 = vset.pattern.permute.xlu0 0
    %711 = vperm.xlu0 %710, %v585
    %v712 = vpop.permute.xlu0 %711
    %715 = vset.pattern.permute.xlu0 0
    %716 = vperm.xlu0 %715, %v586
    %v717 = vpop.permute.xlu0 %716
    %720 = vset.pattern.permute.xlu0 0
    %721 = vperm.xlu0 %720, %v587
    %v722 = vpop.permute.xlu0 %721
    %725 = vset.pattern.permute.xlu0 0
    %726 = vperm.xlu0 %725, %v588
    %v727 = vpop.permute.xlu0 %726
    %730 = vset.pattern.permute.xlu0 0
    %731 = vperm.xlu0 %730, %v589
    %v732 = vpop.permute.xlu0 %731
    %735 = vset.pattern.permute.xlu0 0
    %736 = vperm.xlu0 %735, %v590
    %v737 = vpop.permute.xlu0 %736
    %740 = vset.pattern.permute.xlu0 0
    %741 = vperm.xlu0 %740, %v591
    %v742 = vpop.permute.xlu0 %741
    %745 = vset.pattern.permute.xlu0 0
    %746 = vperm.xlu0 %745, %v592
    %v747 = vpop.permute.xlu0 %746
    %750 = vset.pattern.permute.xlu0 0
    %751 = vperm.xlu0 %750, %v593
    %v752 = vpop.permute.xlu0 %751
    %v786 = vunpack.c.l.b16 %v514
    %v787 = vunpack.c.h.b16 %v514
    %v788 = vunpack.c.l.b16 %v515
    %v789 = vunpack.c.h.b16 %v515
    %v790 = vunpack.c.l.b16 %v516
    %v791 = vunpack.c.h.b16 %v516
    %v792 = vunpack.c.l.b16 %v517
    %v793 = vunpack.c.h.b16 %v517
    %v794 = vunpack.c.l.b16 %v518
    %v795 = vunpack.c.h.b16 %v518
    %v796 = vunpack.c.l.b16 %v519
    %v797 = vunpack.c.h.b16 %v519
    %v798 = vunpack.c.l.b16 %v520
    %v799 = vunpack.c.h.b16 %v520
    %v800 = vunpack.c.l.b16 %v521
    %v801 = vunpack.c.h.b16 %v521
    %v802 = vunpack.c.l.b16 %v522
    %v803 = vunpack.c.h.b16 %v522
    %v804 = vunpack.c.l.b16 %v523
    %v805 = vunpack.c.h.b16 %v523
    %v806 = vunpack.c.l.b16 %v524
    %v807 = vunpack.c.h.b16 %v524
    %v808 = vunpack.c.l.b16 %v525
    %v809 = vunpack.c.h.b16 %v525
    %v810 = vunpack.c.l.b16 %v526
    %v811 = vunpack.c.h.b16 %v526
    %v812 = vunpack.c.l.b16 %v527
    %v813 = vunpack.c.h.b16 %v527
    %v814 = vunpack.c.l.b16 %v528
    %v815 = vunpack.c.h.b16 %v528
    %v816 = vunpack.c.l.b16 %v529
    %v817 = vunpack.c.h.b16 %v529
    %v818 = vunpack.c.l.b16 %v530
    %v819 = vunpack.c.h.b16 %v530
    %v820 = vunpack.c.l.b16 %v531
    %v821 = vunpack.c.h.b16 %v531
    %v822 = vunpack.c.l.b16 %v532
    %v823 = vunpack.c.h.b16 %v532
    %v824 = vunpack.c.l.b16 %v533
    %v825 = vunpack.c.h.b16 %v533
    %v826 = vunpack.c.l.b16 %v534
    %v827 = vunpack.c.h.b16 %v534
    %v828 = vunpack.c.l.b16 %v535
    %v829 = vunpack.c.h.b16 %v535
    %v830 = vunpack.c.l.b16 %v536
    %v831 = vunpack.c.h.b16 %v536
    %v832 = vunpack.c.l.b16 %v537
    %v833 = vunpack.c.h.b16 %v537
    %v834 = vunpack.c.l.b16 %v538
    %v835 = vunpack.c.h.b16 %v538
    %v836 = vunpack.c.l.b16 %v539
    %v837 = vunpack.c.h.b16 %v539
    %v838 = vunpack.c.l.b16 %v540
    %v839 = vunpack.c.h.b16 %v540
    %v840 = vunpack.c.l.b16 %v541
    %v841 = vunpack.c.h.b16 %v541
    %v842 = vunpack.c.l.b16 %v542
    %v843 = vunpack.c.h.b16 %v542
    %v844 = vunpack.c.l.b16 %v543
    %v845 = vunpack.c.h.b16 %v543
    %v846 = vunpack.c.l.b16 %v544
    %v847 = vunpack.c.h.b16 %v544
    %v848 = vunpack.c.l.b16 %v545
    %v849 = vunpack.c.h.b16 %v545
    %v850 = vpack.c.b16 %v788, %v786
    %v851 = vpack.c.b16 %v789, %v787
    %v852 = vpack.c.b16 %v792, %v790
    %v853 = vpack.c.b16 %v793, %v791
    %v854 = vpack.c.b16 %v796, %v794
    %v855 = vpack.c.b16 %v797, %v795
    %v856 = vpack.c.b16 %v800, %v798
    %v857 = vpack.c.b16 %v801, %v799
    %v858 = vpack.c.b16 %v804, %v802
    %v859 = vpack.c.b16 %v805, %v803
    %v860 = vpack.c.b16 %v808, %v806
    %v861 = vpack.c.b16 %v809, %v807
    %v862 = vpack.c.b16 %v812, %v810
    %v863 = vpack.c.b16 %v813, %v811
    %v864 = vpack.c.b16 %v816, %v814
    %v865 = vpack.c.b16 %v817, %v815
    %v866 = vpack.c.b16 %v820, %v818
    %v867 = vpack.c.b16 %v821, %v819
    %v868 = vpack.c.b16 %v824, %v822
    %v869 = vpack.c.b16 %v825, %v823
    %v870 = vpack.c.b16 %v828, %v826
    %v871 = vpack.c.b16 %v829, %v827
    %v872 = vpack.c.b16 %v832, %v830
    %v873 = vpack.c.b16 %v833, %v831
    %v874 = vpack.c.b16 %v836, %v834
    %v875 = vpack.c.b16 %v837, %v835
    %v876 = vpack.c.b16 %v840, %v838
    %v877 = vpack.c.b16 %v841, %v839
    %v878 = vpack.c.b16 %v844, %v842
    %v879 = vpack.c.b16 %v845, %v843
    %v880 = vpack.c.b16 %v848, %v846
    %v881 = vpack.c.b16 %v849, %v847
    %914 = vmatpush.bf16.msra.mxu0 %v553
    %915 = vmatpush.bf16.msra.mxu0 %v552
    %916 = vmatpush.bf16.msra.mxu0 %v551
    %917 = vmatpush.bf16.msra.mxu0 %v550
    %918 = vmatpush.bf16.msra.mxu0 %v549
    %919 = vmatpush.bf16.msra.mxu0 %v548
    %920 = vmatpush.bf16.msra.mxu0 %v547
    %921 = vmatpush.bf16.msra.mxu0 %v546
    %922 = vmatmul.bf16.gmra.mxu0 %v850
    %v923 = vpop.f32.mrf.mxu0
    %v924 = vadd.f32 %v597, %v923
    %v925 = vpop.f32.mrf.mxu0
    %v926 = vadd.f32 %v602, %v925
    %927 = vmatmul.bf16.gmra.mxu0 %v852
    %v928 = vpop.f32.mrf.mxu0
    %v929 = vadd.f32 %v607, %v928
    %v930 = vpop.f32.mrf.mxu0
    %v931 = vadd.f32 %v612, %v930
    %932 = vmatmul.bf16.gmra.mxu0 %v854
    %v933 = vpop.f32.mrf.mxu0
    %v934 = vadd.f32 %v617, %v933
    %v935 = vpop.f32.mrf.mxu0
    %v936 = vadd.f32 %v622, %v935
    %937 = vmatmul.bf16.gmra.mxu0 %v856
    %v938 = vpop.f32.mrf.mxu0
    %v939 = vadd.f32 %v627, %v938
    %v940 = vpop.f32.mrf.mxu0
    %v941 = vadd.f32 %v632, %v940
    %942 = vmatmul.bf16.gmra.mxu0 %v858
    %v943 = vpop.f32.mrf.mxu0
    %v944 = vadd.f32 %v637, %v943
    %v945 = vpop.f32.mrf.mxu0
    %v946 = vadd.f32 %v642, %v945
    %947 = vmatmul.bf16.gmra.mxu0 %v860
    %v948 = vpop.f32.mrf.mxu0
    %v949 = vadd.f32 %v647, %v948
    %v950 = vpop.f32.mrf.mxu0
    %v951 = vadd.f32 %v652, %v950
    %952 = vmatmul.bf16.gmra.mxu0 %v862
    %v953 = vpop.f32.mrf.mxu0
    %v954 = vadd.f32 %v657, %v953
    %v955 = vpop.f32.mrf.mxu0
    %v956 = vadd.f32 %v662, %v955
    %957 = vmatmul.bf16.gmra.mxu0 %v864
    %v958 = vpop.f32.mrf.mxu0
    %v959 = vadd.f32 %v667, %v958
    %v960 = vpop.f32.mrf.mxu0
    %v961 = vadd.f32 %v672, %v960
    %962 = vmatmul.bf16.gmra.mxu0 %v866
    %v963 = vpop.f32.mrf.mxu0
    %v964 = vadd.f32 %v677, %v963
    %v965 = vpop.f32.mrf.mxu0
    %v966 = vadd.f32 %v682, %v965
    %967 = vmatmul.bf16.gmra.mxu0 %v868
    %v968 = vpop.f32.mrf.mxu0
    %v969 = vadd.f32 %v687, %v968
    %v970 = vpop.f32.mrf.mxu0
    %v971 = vadd.f32 %v692, %v970
    %972 = vmatmul.bf16.gmra.mxu0 %v870
    %v973 = vpop.f32.mrf.mxu0
    %v974 = vadd.f32 %v697, %v973
    %v975 = vpop.f32.mrf.mxu0
    %v976 = vadd.f32 %v702, %v975
    %977 = vmatmul.bf16.gmra.mxu0 %v872
    %v978 = vpop.f32.mrf.mxu0
    %v979 = vadd.f32 %v707, %v978
    %v980 = vpop.f32.mrf.mxu0
    %v981 = vadd.f32 %v712, %v980
    %982 = vmatmul.bf16.gmra.mxu0 %v874
    %v983 = vpop.f32.mrf.mxu0
    %v984 = vadd.f32 %v717, %v983
    %v985 = vpop.f32.mrf.mxu0
    %v986 = vadd.f32 %v722, %v985
    %987 = vmatmul.bf16.gmra.mxu0 %v876
    %v988 = vpop.f32.mrf.mxu0
    %v989 = vadd.f32 %v727, %v988
    %v990 = vpop.f32.mrf.mxu0
    %v991 = vadd.f32 %v732, %v990
    %992 = vmatmul.bf16.gmra.mxu0 %v878
    %v993 = vpop.f32.mrf.mxu0
    %v994 = vadd.f32 %v737, %v993
    %v995 = vpop.f32.mrf.mxu0
    %v996 = vadd.f32 %v742, %v995
    %997 = vmatmul.bf16.gmra.mxu0 %v880
    %v998 = vpop.f32.mrf.mxu0
    %v999 = vadd.f32 %v747, %v998
    %v1000 = vpop.f32.mrf.mxu0
    %v1001 = vadd.f32 %v752, %v1000
    %1002 = vdwg.mxu0
    %1003 = vmatpush.bf16.msra.mxu0 %v561
    %1004 = vmatpush.bf16.msra.mxu0 %v560
    %1005 = vmatpush.bf16.msra.mxu0 %v559
    %1006 = vmatpush.bf16.msra.mxu0 %v558
    %1007 = vmatpush.bf16.msra.mxu0 %v557
    %1008 = vmatpush.bf16.msra.mxu0 %v556
    %1009 = vmatpush.bf16.msra.mxu0 %v555
    %1010 = vmatpush.bf16.msra.mxu0 %v554
    %1011 = vmatmul.bf16.gmra.mxu0 %v851
    %v1012 = vpop.f32.mrf.mxu0
    %v1013 = vadd.f32 %v924, %v1012
    %v1014 = vpop.f32.mrf.mxu0
    %v1015 = vadd.f32 %v926, %v1014
    %1016 = vmatmul.bf16.gmra.mxu0 %v853
    %v1017 = vpop.f32.mrf.mxu0
    %v1018 = vadd.f32 %v929, %v1017
    %v1019 = vpop.f32.mrf.mxu0
    %v1020 = vadd.f32 %v931, %v1019
    %1021 = vmatmul.bf16.gmra.mxu0 %v855
    %v1022 = vpop.f32.mrf.mxu0
    %v1023 = vadd.f32 %v934, %v1022
    %v1024 = vpop.f32.mrf.mxu0
    %v1025 = vadd.f32 %v936, %v1024
    %1026 = vmatmul.bf16.gmra.mxu0 %v857
    %v1027 = vpop.f32.mrf.mxu0
    %v1028 = vadd.f32 %v939, %v1027
    %v1029 = vpop.f32.mrf.mxu0
    %v1030 = vadd.f32 %v941, %v1029
    %1031 = vmatmul.bf16.gmra.mxu0 %v859
    %v1032 = vpop.f32.mrf.mxu0
    %v1033 = vadd.f32 %v944, %v1032
    %v1034 = vpop.f32.mrf.mxu0
    %v1035 = vadd.f32 %v946, %v1034
    %1036 = vmatmul.bf16.gmra.mxu0 %v861
    %v1037 = vpop.f32.mrf.mxu0
    %v1038 = vadd.f32 %v949, %v1037
    %v1039 = vpop.f32.mrf.mxu0
    %v1040 = vadd.f32 %v951, %v1039
    %1041 = vmatmul.bf16.gmra.mxu0 %v863
    %v1042 = vpop.f32.mrf.mxu0
    %v1043 = vadd.f32 %v954, %v1042
    %v1044 = vpop.f32.mrf.mxu0
    %v1045 = vadd.f32 %v956, %v1044
    %1046 = vmatmul.bf16.gmra.mxu0 %v865
    %v1047 = vpop.f32.mrf.mxu0
    %v1048 = vadd.f32 %v959, %v1047
    %v1049 = vpop.f32.mrf.mxu0
    %v1050 = vadd.f32 %v961, %v1049
    %1051 = vmatmul.bf16.gmra.mxu0 %v867
    %v1052 = vpop.f32.mrf.mxu0
    %v1053 = vadd.f32 %v964, %v1052
    %v1054 = vpop.f32.mrf.mxu0
    %v1055 = vadd.f32 %v966, %v1054
    %1056 = vmatmul.bf16.gmra.mxu0 %v869
    %v1057 = vpop.f32.mrf.mxu0
    %v1058 = vadd.f32 %v969, %v1057
    %v1059 = vpop.f32.mrf.mxu0
    %v1060 = vadd.f32 %v971, %v1059
    %1061 = vmatmul.bf16.gmra.mxu0 %v871
    %v1062 = vpop.f32.mrf.mxu0
    %v1063 = vadd.f32 %v974, %v1062
    %v1064 = vpop.f32.mrf.mxu0
    %v1065 = vadd.f32 %v976, %v1064
    %1066 = vmatmul.bf16.gmra.mxu0 %v873
    %v1067 = vpop.f32.mrf.mxu0
    %v1068 = vadd.f32 %v979, %v1067
    %v1069 = vpop.f32.mrf.mxu0
    %v1070 = vadd.f32 %v981, %v1069
    %1071 = vmatmul.bf16.gmra.mxu0 %v875
    %v1072 = vpop.f32.mrf.mxu0
    %v1073 = vadd.f32 %v984, %v1072
    %v1074 = vpop.f32.mrf.mxu0
    %v1075 = vadd.f32 %v986, %v1074
    %1076 = vmatmul.bf16.gmra.mxu0 %v877
    %v1077 = vpop.f32.mrf.mxu0
    %v1078 = vadd.f32 %v989, %v1077
    %v1079 = vpop.f32.mrf.mxu0
    %v1080 = vadd.f32 %v991, %v1079
    %1081 = vmatmul.bf16.gmra.mxu0 %v879
    %v1082 = vpop.f32.mrf.mxu0
    %v1083 = vadd.f32 %v994, %v1082
    %v1084 = vpop.f32.mrf.mxu0
    %v1085 = vadd.f32 %v996, %v1084
    %1086 = vmatmul.bf16.gmra.mxu0 %v881
    %v1087 = vpop.f32.mrf.mxu0
    %v1088 = vadd.f32 %v999, %v1087
    %v1089 = vpop.f32.mrf.mxu0
    %v1090 = vadd.f32 %v1001, %v1089
    %1091 = vdwg.mxu0
    %v1092 = vmax.f32 %v1013, 0.0
    %v1093 = vmax.f32 %v1015, 0.0
    %v1094 = vmax.f32 %v1018, 0.0
    %v1095 = vmax.f32 %v1020, 0.0
    %v1096 = vmax.f32 %v1023, 0.0
    %v1097 = vmax.f32 %v1025, 0.0
    %v1098 = vmax.f32 %v1028, 0.0
    %v1099 = vmax.f32 %v1030, 0.0
    %v1100 = vmax.f32 %v1033, 0.0
    %v1101 = vmax.f32 %v1035, 0.0
    %v1102 = vmax.f32 %v1038, 0.0
    %v1103 = vmax.f32 %v1040, 0.0
    %v1104 = vmax.f32 %v1043, 0.0
    %v1105 = vmax.f32 %v1045, 0.0
    %v1106 = vmax.f32 %v1048, 0.0
    %v1107 = vmax.f32 %v1050, 0.0
    %v1108 = vmax.f32 %v1053, 0.0
    %v1109 = vmax.f32 %v1055, 0.0
    %v1110 = vmax.f32 %v1058, 0.0
    %v1111 = vmax.f32 %v1060, 0.0
    %v1112 = vmax.f32 %v1063, 0.0
    %v1113 = vmax.f32 %v1065, 0.0
    %v1114 = vmax.f32 %v1068, 0.0
    %v1115 = vmax.f32 %v1070, 0.0
    %v1116 = vmax.f32 %v1073, 0.0
    %v1117 = vmax.f32 %v1075, 0.0
    %v1118 = vmax.f32 %v1078, 0.0
    %v1119 = vmax.f32 %v1080, 0.0
    %v1120 = vmax.f32 %v1083, 0.0
    %v1121 = vmax.f32 %v1085, 0.0
    %v1122 = vmax.f32 %v1088, 0.0
    %v1123 = vmax.f32 %v1090, 0.0
    %v1124 = vld [vmem:[%s5] sm:$0xff]
    %v1125 = vld [vmem:[%s5 + $0x8] sm:$0xff]
    %v1126 = vld [vmem:[%s5 + $0x10] sm:$0xff]
    %v1127 = vld [vmem:[%s5 + $0x18] sm:$0xff]
    %v1128 = vld [vmem:[%s5 + $0x20] sm:$0xff]
    %v1129 = vld [vmem:[%s5 + $0x28] sm:$0xff]
    %v1130 = vld [vmem:[%s5 + $0x30] sm:$0xff]
    %v1131 = vld [vmem:[%s5 + $0x38] sm:$0xff]
    %v1132 = vld [vmem:[%s5 + $0x40] sm:$0xff]
    %v1133 = vld [vmem:[%s5 + $0x48] sm:$0xff]
    %v1134 = vld [vmem:[%s5 + $0x50] sm:$0xff]
    %v1135 = vld [vmem:[%s5 + $0x58] sm:$0xff]
    %v1136 = vld [vmem:[%s5 + $0x60] sm:$0xff]
    %v1137 = vld [vmem:[%s5 + $0x68] sm:$0xff]
    %v1138 = vld [vmem:[%s5 + $0x70] sm:$0xff]
    %v1139 = vld [vmem:[%s5 + $0x78] sm:$0xff]
    %v1140 = vld [vmem:[%s5 + $0x80] sm:$0xff]
    %v1141 = vld [vmem:[%s5 + $0x88] sm:$0xff]
    %v1142 = vld [vmem:[%s5 + $0x90] sm:$0xff]
    %v1143 = vld [vmem:[%s5 + $0x98] sm:$0xff]
    %v1144 = vld [vmem:[%s5 + $0xa0] sm:$0xff]
    %v1145 = vld [vmem:[%s5 + $0xa8] sm:$0xff]
    %v1146 = vld [vmem:[%s5 + $0xb0] sm:$0xff]
    %v1147 = vld [vmem:[%s5 + $0xb8] sm:$0xff]
    %v1148 = vld [vmem:[%s5 + $0xc0] sm:$0xff]
    %v1149 = vld [vmem:[%s5 + $0xc8] sm:$0xff]
    %v1150 = vld [vmem:[%s5 + $0xd0] sm:$0xff]
    %v1151 = vld [vmem:[%s5 + $0xd8] sm:$0xff]
    %v1152 = vld [vmem:[%s5 + $0xe0] sm:$0xff]
    %v1153 = vld [vmem:[%s5 + $0xe8] sm:$0xff]
    %v1154 = vld [vmem:[%s5 + $0xf0] sm:$0xff]
    %v1155 = vld [vmem:[%s5 + $0xf8] sm:$0xff]
    %1157 = vset.pattern.permute.xlu0 0
    %1158 = vperm.xlu0 %1157, %v1124
    %v1159 = vpop.permute.xlu0 %1158
    %1162 = vset.pattern.permute.xlu0 0
    %1163 = vperm.xlu0 %1162, %v1125
    %v1164 = vpop.permute.xlu0 %1163
    %1167 = vset.pattern.permute.xlu0 0
    %1168 = vperm.xlu0 %1167, %v1126
    %v1169 = vpop.permute.xlu0 %1168
    %1172 = vset.pattern.permute.xlu0 0
    %1173 = vperm.xlu0 %1172, %v1127
    %v1174 = vpop.permute.xlu0 %1173
    %1177 = vset.pattern.permute.xlu0 0
    %1178 = vperm.xlu0 %1177, %v1128
    %v1179 = vpop.permute.xlu0 %1178
    %1182 = vset.pattern.permute.xlu0 0
    %1183 = vperm.xlu0 %1182, %v1129
    %v1184 = vpop.permute.xlu0 %1183
    %1187 = vset.pattern.permute.xlu0 0
    %1188 = vperm.xlu0 %1187, %v1130
    %v1189 = vpop.permute.xlu0 %1188
    %1192 = vset.pattern.permute.xlu0 0
    %1193 = vperm.xlu0 %1192, %v1131
    %v1194 = vpop.permute.xlu0 %1193
    %1197 = vset.pattern.permute.xlu0 0
    %1198 = vperm.xlu0 %1197, %v1132
    %v1199 = vpop.permute.xlu0 %1198
    %1202 = vset.pattern.permute.xlu0 0
    %1203 = vperm.xlu0 %1202, %v1133
    %v1204 = vpop.permute.xlu0 %1203
    %1207 = vset.pattern.permute.xlu0 0
    %1208 = vperm.xlu0 %1207, %v1134
    %v1209 = vpop.permute.xlu0 %1208
    %1212 = vset.pattern.permute.xlu0 0
    %1213 = vperm.xlu0 %1212, %v1135
    %v1214 = vpop.permute.xlu0 %1213
    %1217 = vset.pattern.permute.xlu0 0
    %1218 = vperm.xlu0 %1217, %v1136
    %v1219 = vpop.permute.xlu0 %1218
    %1222 = vset.pattern.permute.xlu0 0
    %1223 = vperm.xlu0 %1222, %v1137
    %v1224 = vpop.permute.xlu0 %1223
    %1227 = vset.pattern.permute.xlu0 0
    %1228 = vperm.xlu0 %1227, %v1138
    %v1229 = vpop.permute.xlu0 %1228
    %1232 = vset.pattern.permute.xlu0 0
    %1233 = vperm.xlu0 %1232, %v1139
    %v1234 = vpop.permute.xlu0 %1233
    %1237 = vset.pattern.permute.xlu0 0
    %1238 = vperm.xlu0 %1237, %v1140
    %v1239 = vpop.permute.xlu0 %1238
    %1242 = vset.pattern.permute.xlu0 0
    %1243 = vperm.xlu0 %1242, %v1141
    %v1244 = vpop.permute.xlu0 %1243
    %1247 = vset.pattern.permute.xlu0 0
    %1248 = vperm.xlu0 %1247, %v1142
    %v1249 = vpop.permute.xlu0 %1248
    %1252 = vset.pattern.permute.xlu0 0
    %1253 = vperm.xlu0 %1252, %v1143
    %v1254 = vpop.permute.xlu0 %1253
    %1257 = vset.pattern.permute.xlu0 0
    %1258 = vperm.xlu0 %1257, %v1144
    %v1259 = vpop.permute.xlu0 %1258
    %1262 = vset.pattern.permute.xlu0 0
    %1263 = vperm.xlu0 %1262, %v1145
    %v1264 = vpop.permute.xlu0 %1263
    %1267 = vset.pattern.permute.xlu0 0
    %1268 = vperm.xlu0 %1267, %v1146
    %v1269 = vpop.permute.xlu0 %1268
    %1272 = vset.pattern.permute.xlu0 0
    %1273 = vperm.xlu0 %1272, %v1147
    %v1274 = vpop.permute.xlu0 %1273
    %1277 = vset.pattern.permute.xlu0 0
    %1278 = vperm.xlu0 %1277, %v1148
    %v1279 = vpop.permute.xlu0 %1278
    %1282 = vset.pattern.permute.xlu0 0
    %1283 = vperm.xlu0 %1282, %v1149
    %v1284 = vpop.permute.xlu0 %1283
    %1287 = vset.pattern.permute.xlu0 0
    %1288 = vperm.xlu0 %1287, %v1150
    %v1289 = vpop.permute.xlu0 %1288
    %1292 = vset.pattern.permute.xlu0 0
    %1293 = vperm.xlu0 %1292, %v1151
    %v1294 = vpop.permute.xlu0 %1293
    %1297 = vset.pattern.permute.xlu0 0
    %1298 = vperm.xlu0 %1297, %v1152
    %v1299 = vpop.permute.xlu0 %1298
    %1302 = vset.pattern.permute.xlu0 0
    %1303 = vperm.xlu0 %1302, %v1153
    %v1304 = vpop.permute.xlu0 %1303
    %1307 = vset.pattern.permute.xlu0 0
    %1308 = vperm.xlu0 %1307, %v1154
    %v1309 = vpop.permute.xlu0 %1308
    %1312 = vset.pattern.permute.xlu0 0
    %1313 = vperm.xlu0 %1312, %v1155
    %v1314 = vpop.permute.xlu0 %1313
    %v1316 = vmul.f32 %v1092, %v1159
    %v1317 = vmul.f32 %v1093, %v1164
    %v1318 = vmul.f32 %v1094, %v1169
    %v1319 = vmul.f32 %v1095, %v1174
    %v1320 = vmul.f32 %v1096, %v1179
    %v1321 = vmul.f32 %v1097, %v1184
    %v1322 = vmul.f32 %v1098, %v1189
    %v1323 = vmul.f32 %v1099, %v1194
    %v1324 = vmul.f32 %v1100, %v1199
    %v1325 = vmul.f32 %v1101, %v1204
    %v1326 = vmul.f32 %v1102, %v1209
    %v1327 = vmul.f32 %v1103, %v1214
    %v1328 = vmul.f32 %v1104, %v1219
    %v1329 = vmul.f32 %v1105, %v1224
    %v1330 = vmul.f32 %v1106, %v1229
    %v1331 = vmul.f32 %v1107, %v1234
    %v1332 = vmul.f32 %v1108, %v1239
    %v1333 = vmul.f32 %v1109, %v1244
    %v1334 = vmul.f32 %v1110, %v1249
    %v1335 = vmul.f32 %v1111, %v1254
    %v1336 = vmul.f32 %v1112, %v1259
    %v1337 = vmul.f32 %v1113, %v1264
    %v1338 = vmul.f32 %v1114, %v1269
    %v1339 = vmul.f32 %v1115, %v1274
    %v1340 = vmul.f32 %v1116, %v1279
    %v1341 = vmul.f32 %v1117, %v1284
    %v1342 = vmul.f32 %v1118, %v1289
    %v1343 = vmul.f32 %v1119, %v1294
    %v1344 = vmul.f32 %v1120, %v1299
    %v1345 = vmul.f32 %v1121, %v1304
    %v1346 = vmul.f32 %v1122, %v1309
    %v1347 = vmul.f32 %v1123, %v1314
    %v1348 = vadd.f32 %v1316, %v1317
    %v1349 = vadd.f32 %v1348, %v1318
    %v1350 = vadd.f32 %v1349, %v1319
    %v1351 = vadd.f32 %v1350, %v1320
    %v1352 = vadd.f32 %v1351, %v1321
    %v1353 = vadd.f32 %v1352, %v1322
    %v1354 = vadd.f32 %v1353, %v1323
    %v1355 = vadd.f32 %v1354, %v1324
    %v1356 = vadd.f32 %v1355, %v1325
    %v1357 = vadd.f32 %v1356, %v1326
    %v1358 = vadd.f32 %v1357, %v1327
    %v1359 = vadd.f32 %v1358, %v1328
    %v1360 = vadd.f32 %v1359, %v1329
    %v1361 = vadd.f32 %v1360, %v1330
    %v1362 = vadd.f32 %v1361, %v1331
    %v1363 = vadd.f32 %v1362, %v1332
    %v1364 = vadd.f32 %v1363, %v1333
    %v1365 = vadd.f32 %v1364, %v1334
    %v1366 = vadd.f32 %v1365, %v1335
    %v1367 = vadd.f32 %v1366, %v1336
    %v1368 = vadd.f32 %v1367, %v1337
    %v1369 = vadd.f32 %v1368, %v1338
    %v1370 = vadd.f32 %v1369, %v1339
    %v1371 = vadd.f32 %v1370, %v1340
    %v1372 = vadd.f32 %v1371, %v1341
    %v1373 = vadd.f32 %v1372, %v1342
    %v1374 = vadd.f32 %v1373, %v1343
    %v1375 = vadd.f32 %v1374, %v1344
    %v1376 = vadd.f32 %v1375, %v1345
    %v1377 = vadd.f32 %v1376, %v1346
    %v1378 = vadd.f32 %v1377, %v1347
    %v1379 = vrot.slane %v1378, 4
    %v1380 = vadd.f32 %v1378, %v1379
    %v1381 = vrot.slane %v1380, 2
    %v1382 = vadd.f32 %v1380, %v1381
    %v1383 = vrot.slane %v1382, 1
    %v1384 = vadd.f32 %v1382, %v1383
    %s1385 = sld [smem:[#allocation2]]
    %v1386 = vstv %s1385
    %v1387 = vadd.f32 %v1384, %v1386
    %1388 = vst [vmem:[#allocation3] sm:$0x1] %v1387
    // Predicated region
    $region30: #{tpu_custom_call.1} parent=1 // pred_check
      _
    $region31: #{tpu_custom_call.1} parent=1 // pred_check_branch
      %1390 = sbr.rel (0) target = $region33
    $region32: #{tpu_custom_call.1} parent=1 // pred_region
      %1392 = vsyncadd [#allocation4], 0
      %s1394 = sshll.u32 [#allocation3], 4
      %s1395 = int_to_ptr.vmem [resolvable:$true] %s1394
      %s1396 = sshll.u32 %s7, 4
      %s1397 = int_to_ptr.hbm [resolvable:$true] %s1396
      %1399 = dma.vmem_to_hbm [thread:$0]  %s1395, 16, %s1397, [#allocation4]
    $region33: #{tpu_custom_call.1} parent=1 // pred_fallthru
      _
    // Predicated region
    $region34: #{tpu_custom_call.1} parent=1 // pred_check
      _
    $region35: #{tpu_custom_call.1} parent=1 // pred_check_branch
      %1401 = sbr.rel (0) target = $region37
    $region36: #{tpu_custom_call.1} parent=1 // pred_region
      %1403 = dma.done [#allocation4], 16
    $region37: #{tpu_custom_call.1} parent=1 // pred_fallthru
      _
    %1404 = vsyncpa [#allocation4], 1

</llo_original>
